<compile_context>
chip_gen: v7x
topology: tpu7x:2x2x1
jax: 0.10.0
libtpu: 0.0.40
codegen_flags: <defaults>
</compile_context>

<pallas_src>
import numpy as np
import jax
import jax.numpy as jnp
from jax.experimental import pallas as pl
from jax.experimental.pallas import tpu as pltpu

LANES = 128                # lane width (last dim maps to the 128-wide lane axis)
DEFAULT_TILE_ROWS = 2048   # (2048, 128) f32 = 1 MiB per input tile; 2 inputs x 2 bufs = 4 MiB VMEM


def mse_partial_kernel(pred_ref, gt_ref, out_ref):
    # pred_ref, gt_ref: (TILE_ROWS, 128) f32 tiles.  out_ref: (8, 128) f32 per-tile partial sum.
    d = pred_ref[...] - gt_ref[...]
    sq = d * d
    rows, lanes = sq.shape
    # Fold sublane groups with a leading-axis reduce: pure vector adds (VPU), no XLU
    # cross-lane reduction, and the (8, 128) result is a full unmasked lane-dense store.
    out_ref[...] = jnp.sum(sq.reshape(rows // 8, 8, lanes), axis=0)


def mse_pallas(registration_pred, registration_gt, coords=None, wandb=None,
               tile_rows=DEFAULT_TILE_ROWS):
    # coords / wandb are unused by the original module's forward; accepted for signature parity.
    pred = jnp.asarray(registration_pred, jnp.float32)
    gt = jnp.asarray(registration_gt, jnp.float32)
    assert pred.shape == gt.shape, "registration_pred / registration_gt shape mismatch"

    total = int(np.prod(pred.shape))            # true element count for the mean
    rows = -(-total // LANES)                   # ceil(total / 128)
    rows = -(-rows // 8) * 8                    # sublane-align (multiple of 8)
    tile_rows = min(tile_rows, rows)            # shrink tile for small inputs (still mult. of 8)
    rows = -(-rows // tile_rows) * tile_rows    # rows is a multiple of the tile
    padded = rows * LANES

    p_flat = jnp.ravel(pred)
    g_flat = jnp.ravel(gt)
    if padded != total:
        # Zero-pad BOTH inputs: padded lanes give diff == 0 and add nothing to the sum.
        p_flat = jnp.pad(p_flat, (0, padded - total))
        g_flat = jnp.pad(g_flat, (0, padded - total))
    p2 = p_flat.reshape(rows, LANES)
    g2 = g_flat.reshape(rows, LANES)

    num_tiles = rows // tile_rows
    partials = pl.pallas_call(
        mse_partial_kernel,
        out_shape=jax.ShapeDtypeStruct((num_tiles * 8, LANES), jnp.float32),
        grid=(num_tiles,),
        in_specs=[
            pl.BlockSpec((tile_rows, LANES), lambda i: (i, 0)),
            pl.BlockSpec((tile_rows, LANES), lambda i: (i, 0)),
        ],
        out_specs=pl.BlockSpec((8, LANES), lambda i: (i, 0)),
        compiler_params=pltpu.CompilerParams(
            # Every block writes an independent output tile -> megacore sharding on v7x.
            dimension_semantics=("parallel",)),
    )(p2, g2)

    # Tiny final reduce (num_tiles * 8 * 128 partials) + mean, done in plain JAX.
    return jnp.sum(partials) / total


if __name__ == "__main__":
    key = jax.random.PRNGKey(0)
    k1, k2, k3, k4 = jax.random.split(key, 4)

    # Small keypoint-style inputs (batch=2, 300 keypoints, 3 coords) — exercises the ragged tail.
    pred_a = jax.random.normal(k1, (2, 300, 3), dtype=jnp.float32)
    gt_a = jax.random.normal(k2, (2, 300, 3), dtype=jnp.float32)
    loss_a = jax.block_until_ready(mse_pallas(pred_a, gt_a, coords=None, wandb=None))
    ref_a = jnp.mean((pred_a - gt_a) ** 2)
    np.testing.assert_allclose(np.asarray(loss_a), np.asarray(ref_a), rtol=1e-5, atol=1e-6)

    # Moderate size — exercises the multi-tile, parallel-grid pipelined path.
    pred_b = jax.random.normal(k3, (4, 32768, 3), dtype=jnp.float32)
    gt_b = jax.random.normal(k4, (4, 32768, 3), dtype=jnp.float32)
    loss_b = jax.block_until_ready(mse_pallas(pred_b, gt_b, coords=None, wandb=None))
    ref_b = jnp.mean((pred_b - gt_b) ** 2)
    np.testing.assert_allclose(np.asarray(loss_b), np.asarray(ref_b), rtol=1e-5, atol=1e-6)

    print("KERNEL_OK")
</pallas_src>

<mosaic_0001>
module attributes {stable_mosaic.version = 11 : i64} {
  func.func @mse_partial_kernel(%arg0: i32, %arg1: memref<16x128xf32, #tpu.memory_space<vmem>>, %arg2: memref<16x128xf32, #tpu.memory_space<vmem>>, %arg3: memref<8x128xf32, #tpu.memory_space<vmem>>) attributes {dimension_semantics = [#tpu.dimension_semantics<parallel>], iteration_bounds = array<i64: 1>, scalar_prefetch = 0 : i64, scratch_operands = 0 : i64, tpu.core_type = #tpu.core_type<tc>, window_params = [{transform_indices = @transform_0, window_bounds = array<i64: 16, 128>}, {transform_indices = @transform_1, window_bounds = array<i64: 16, 128>}, {transform_indices = @transform_2, window_bounds = array<i64: 8, 128>}]} {
    %c0 = arith.constant 0 : index
    %c0_0 = arith.constant 0 : index
    %0 = vector.load %arg1[%c0, %c0_0] : memref<16x128xf32, #tpu.memory_space<vmem>>, vector<16x128xf32>
    %c0_1 = arith.constant 0 : index
    %c0_2 = arith.constant 0 : index
    %1 = vector.load %arg2[%c0_1, %c0_2] : memref<16x128xf32, #tpu.memory_space<vmem>>, vector<16x128xf32>
    %2 = arith.subf %0, %1 : vector<16x128xf32>
    %3 = arith.mulf %2, %2 : vector<16x128xf32>
    %4 = vector.shape_cast %3 : vector<16x128xf32> to vector<2x8x128xf32>
    %cst = arith.constant dense<0.000000e+00> : vector<8x128xf32>
    %5 = vector.multi_reduction <add>, %4, %cst [0] : vector<2x8x128xf32> to vector<8x128xf32>
    %c0_3 = arith.constant 0 : index
    %c0_4 = arith.constant 0 : index
    %6 = vector.load %arg3[%c0_3, %c0_4] : memref<8x128xf32, #tpu.memory_space<vmem>>, vector<8x128xf32>
    tpu.vector_store %arg3[%c0_3, %c0_4], %5 {strides = array<i32>} : memref<8x128xf32, #tpu.memory_space<vmem>>, vector<8x128xf32>,
    return
  }
  func.func @transform_0(%arg0: i32) -> (i32, i32) {
    %c0_i32 = arith.constant 0 : i32
    %c0_i32_0 = arith.constant 0 : i32
    return %arg0, %c0_i32 : i32, i32
  }
  func.func @transform_1(%arg0: i32) -> (i32, i32) {
    %c0_i32 = arith.constant 0 : i32
    %c0_i32_0 = arith.constant 0 : i32
    return %arg0, %c0_i32 : i32, i32
  }
  func.func @transform_2(%arg0: i32) -> (i32, i32) {
    %c0_i32 = arith.constant 0 : i32
    %c0_i32_0 = arith.constant 0 : i32
    return %arg0, %c0_i32 : i32, i32
  }
}

</mosaic_0001>

<llo_original>
// kernel: tpu_custom_call.1
$region0: #{tpu_custom_call.1}
  #allocation0 [shape = 'u32[]', space=smem, size = 0x4, offset = 0x4, fixed_abs, tag = 'smem constant byte address 0x4 - core index']
  #allocation1 [shape = 'u32[144,128]{1,0:T(1,128)}', space=vmem, size = 0x12000, scoped, tag = 'internal scratch']
  %s0 = inlined_call_operand.hbm [shape: f32[16,128], index: 0, kind: input, shape index: {}]
  %s1 = inlined_call_operand.hbm [shape: f32[16,128], index: 1, kind: input, shape index: {}]
  %s2 = inlined_call_operand.hbm [shape: f32[8,128], index: 2, kind: output, shape index: {}]
  %s3 = sld [smem:[#allocation0]]
  $region26: #{tpu_custom_call.1} parent=0
    _
  %s5 = ssub.s32 1, %s3
  %s6 = scalar_select 0, %s5, %s3
  $region1: #{tpu_custom_call.1} parent=0
    #allocation2 [shape = 'u8[8192]{0}', space=vmem, size = 0x2000, scoped, tag = 'input window, operand 0, single buffered']
    #allocation3 [shape = 's32[1]{0}', space=sflag, size = 0x4, scoped, tag = 'scoped memory for tpu_custom_call.1']
    #allocation4 [shape = 's32[1]{0}', space=sflag, size = 0x4, scoped, tag = 'scoped memory for tpu_custom_call.1']
    #allocation5 [shape = 'u8[8192]{0}', space=vmem, size = 0x2000, scoped, tag = 'input window, operand 1, single buffered']
    #allocation6 [shape = 's32[1]{0}', space=sflag, size = 0x4, scoped, tag = 'scoped memory for tpu_custom_call.1']
    #allocation7 [shape = 'u8[4096]{0}', space=vmem, size = 0x1000, scoped, tag = 'output window, operand 0, single buffered']
    %7 = vsyncpa [#allocation3], 0
    %8 = vsyncpa [#allocation6], 0
    %9 = vsyncpa [#allocation4], 0
    // Predicated region
    $region2: #{tpu_custom_call.1} parent=1 // pred_check
      _
    $region3: #{tpu_custom_call.1} parent=1 // pred_check_branch
      %11 = sbr.rel (0) target = $region5
    $region4: #{tpu_custom_call.1} parent=1 // pred_region
      %s13 = ssub.s32 256, 256
      %14 = vsyncadd [#allocation3], %s13
      %s15 = sshll.u32 [#allocation2], 4
      %s16 = int_to_ptr.vmem [resolvable:$true] %s15
      %21 = dma.hbm_to_vmem [thread:$0]  %s0, 256, %s16, [#allocation3], 128, 128, 8
    $region5: #{tpu_custom_call.1} parent=1 // pred_fallthru
      _
    // Predicated region
    $region6: #{tpu_custom_call.1} parent=1 // pred_check
      _
    $region7: #{tpu_custom_call.1} parent=1 // pred_check_branch
      %23 = sbr.rel (0) target = $region9
    $region8: #{tpu_custom_call.1} parent=1 // pred_region
      %s25 = ssub.s32 256, 256
      %26 = vsyncadd [#allocation6], %s25
      %s27 = sshll.u32 [#allocation5], 4
      %s28 = int_to_ptr.vmem [resolvable:$true] %s27
      %33 = dma.hbm_to_vmem [thread:$0]  %s1, 256, %s28, [#allocation6], 128, 128, 8
    $region9: #{tpu_custom_call.1} parent=1 // pred_fallthru
      _
    // Predicated region
    $region10: #{tpu_custom_call.1} parent=1 // pred_check
      _
    $region11: #{tpu_custom_call.1} parent=1 // pred_check_branch
      %35 = sbr.rel (0) target = $region13
    $region12: #{tpu_custom_call.1} parent=1 // pred_region
      %36 = dma.done [#allocation3], 256
    $region13: #{tpu_custom_call.1} parent=1 // pred_fallthru
      _
    // Predicated region
    $region14: #{tpu_custom_call.1} parent=1 // pred_check
      _
    $region15: #{tpu_custom_call.1} parent=1 // pred_check_branch
      %38 = sbr.rel (0) target = $region17
    $region16: #{tpu_custom_call.1} parent=1 // pred_region
      %39 = dma.done [#allocation6], 256
    $region17: #{tpu_custom_call.1} parent=1 // pred_fallthru
      _
    %v40 = vld [vmem:[#allocation2] sm:$0xff]
    %v41 = vld [vmem:[#allocation2 + $0x8] sm:$0xff]
    %v42 = vld [vmem:[#allocation5] sm:$0xff]
    %v43 = vld [vmem:[#allocation5 + $0x8] sm:$0xff]
    %v44 = vsub.f32 %v40, %v42
    %v45 = vsub.f32 %v41, %v43
    %v46 = vmul.f32 %v44, %v44
    %v47 = vmul.f32 %v45, %v45
    %v48 = vadd.f32 %v46, %v47
    %49 = vst [vmem:[#allocation7] sm:$0xff] %v48
    // Predicated region
    $region18: #{tpu_custom_call.1} parent=1 // pred_check
      _
    $region19: #{tpu_custom_call.1} parent=1 // pred_check_branch
      %51 = sbr.rel (0) target = $region21
    $region20: #{tpu_custom_call.1} parent=1 // pred_region
      %s53 = ssub.s32 128, 128
      %54 = vsyncadd [#allocation4], %s53
      %s56 = sshll.u32 [#allocation7], 4
      %s57 = int_to_ptr.vmem [resolvable:$true] %s56
      %59 = dma.vmem_to_hbm [thread:$0]  %s57, 128, %s2, [#allocation4]
    $region21: #{tpu_custom_call.1} parent=1 // pred_fallthru
      _
    // Predicated region
    $region22: #{tpu_custom_call.1} parent=1 // pred_check
      _
    $region23: #{tpu_custom_call.1} parent=1 // pred_check_branch
      %61 = sbr.rel (0) target = $region25
    $region24: #{tpu_custom_call.1} parent=1 // pred_region
      %62 = dma.done [#allocation4], 128
    $region25: #{tpu_custom_call.1} parent=1 // pred_fallthru
      _
    %63 = vsyncpa [#allocation3], 1
    %64 = vsyncpa [#allocation6], 1
    %65 = vsyncpa [#allocation4], 1

</llo_original>
